<compile_context>
chip_gen: v7x
topology: tpu7x:2x2x1
jax: 0.10.0
libtpu: 0.0.40
codegen_flags: <defaults>
</compile_context>

<pallas_src>
import functools

import jax
import jax.numpy as jnp
from jax.experimental import pallas as pl
from jax.experimental.pallas import tpu as pltpu

_EPS = 1e-5


def _round_up(a, b):
    return (a + b - 1) // b * b


# ----------------------------------------------------------------------------
# Pass 1: conv tile matmul -> per-channel sum / sum-of-squares accumulation
# ----------------------------------------------------------------------------
def conv_stats_kernel(p_ref, w_ref, sum_ref, sumsq_ref):
    @pl.when(pl.program_id(1) == 0)
    def _init():
        sum_ref[...] = jnp.zeros_like(sum_ref)
        sumsq_ref[...] = jnp.zeros_like(sumsq_ref)

    acc = jnp.dot(p_ref[...], w_ref[...], preferred_element_type=jnp.float32)
    groups = acc.shape[0] // 8                     # TR is a multiple of 16
    a3 = acc.reshape(groups, 8, acc.shape[1])      # pure sublane-group split
    sum_ref[...] += jnp.sum(a3, axis=0)            # full-width VPU adds
    sumsq_ref[...] += jnp.sum(a3 * a3, axis=0)


# ----------------------------------------------------------------------------
# Pass 2: conv tile matmul (inv_std pre-folded into weights) -> -bias -> ReLU
# ----------------------------------------------------------------------------
def conv_bn_relu_kernel(p_ref, w_ref, bias_ref, o_ref):
    acc = jnp.dot(p_ref[...], w_ref[...], preferred_element_type=jnp.float32)
    o_ref[...] = jnp.maximum(acc - bias_ref[...], 0.0).astype(o_ref.dtype)


# ----------------------------------------------------------------------------
# Wrapper: NHWC im2col (single materialization, bf16) + two pallas_calls
# ----------------------------------------------------------------------------
@functools.partial(jax.jit, static_argnames=("channels_last",))
def network_forward(x, conv_w, *, channels_last=True):
    """x: (N, 3, H, W) float32, conv_w: (64, 3, 7, 7) float32.

    Conv bias intentionally omitted: under training-mode BN with gamma=1 and
    beta=0, a per-channel conv bias is exactly cancelled by the batch mean.
    Returns NHWC bf16 by default (fast path); channels_last=False gives the
    PyTorch NCHW layout.
    """
    N, Cin, H, W = x.shape
    Cout, _, KH, KW = conv_w.shape
    OH, OW = H - KH + 1, W - KW + 1
    R = N * OH * OW
    K = Cin * KH * KW                                       # 147, NOT padded

    # --- im2col, K ordered (kh, kw, cin); built in bf16, single stack, the
    #     trailing reshape is a contiguous merge (no relayout of the big buf).
    x_nhwc = jnp.transpose(x, (0, 2, 3, 1)).astype(jnp.bfloat16)
    cols = [x_nhwc[:, i:i + OH, j:j + OW, :]
            for i in range(KH) for j in range(KW)]           # 49 x (N,OH,OW,Cin)
    patches = jnp.stack(cols, axis=3).reshape(R, K)          # (R, 147) bf16

    # --- tiling
    Cp = _round_up(Cout, 128)                                # 64 -> 128 (lane-dense out)
    TR = min(1024, _round_up(R, 16))                         # row tile (bf16 sublane pack)
    n_tiles = -(-R // TR)
    splits = 2 if n_tiles >= 2 else 1                        # v7x: 2 TCs for pass 1
    R_pad = _round_up(R, TR * splits)
    n_tiles = R_pad // TR
    steps = n_tiles // splits

    # zero row padding only (padded rows contribute 0 to both stat sums)
    patches_p = jnp.pad(patches, ((0, R_pad - R), (0, 0)))

    # weight flattened to match the (kh, kw, cin) patch order; columns padded
    w_mat = jnp.transpose(conv_w, (2, 3, 1, 0)).reshape(K, Cout)   # f32
    w_pad = jnp.pad(w_mat, ((0, 0), (0, Cp - Cout)))               # (K, Cp) f32
    w1 = w_pad.astype(jnp.bfloat16)

    # --- pass 1: batch statistics
    sums, sumsqs = pl.pallas_call(
        conv_stats_kernel,
        out_shape=(jax.ShapeDtypeStruct((splits * 8, Cp), jnp.float32),
                   jax.ShapeDtypeStruct((splits * 8, Cp), jnp.float32)),
        grid=(splits, steps),
        in_specs=[
            pl.BlockSpec((TR, K), lambda c, s: (c * steps + s, 0)),
            pl.BlockSpec((K, Cp), lambda c, s: (0, 0)),
        ],
        out_specs=[
            pl.BlockSpec((8, Cp), lambda c, s: (c, 0)),
            pl.BlockSpec((8, Cp), lambda c, s: (c, 0)),
        ],
        compiler_params=pltpu.CompilerParams(
            dimension_semantics=("parallel", "arbitrary")),
    )(patches_p, w1)

    # --- finalize BN stats; fold inv_std into the pass-2 weights
    count = jnp.float32(R)
    mean = jnp.sum(sums, axis=0, keepdims=True) / count            # (1, Cp)
    ex2 = jnp.sum(sumsqs, axis=0, keepdims=True) / count
    var = jnp.maximum(ex2 - mean * mean, 0.0)                      # biased var (PyTorch fwd)
    inv_std = jax.lax.rsqrt(var + _EPS)
    w2 = (w_pad * inv_std).astype(jnp.bfloat16)                    # per-column scale
    bias = mean * inv_std                                          # (1, Cp) f32

    # --- pass 2: normalize + ReLU, bf16 lane-dense output
    out_p = pl.pallas_call(
        conv_bn_relu_kernel,
        out_shape=jax.ShapeDtypeStruct((R_pad, Cp), jnp.bfloat16),
        grid=(n_tiles,),
        in_specs=[
            pl.BlockSpec((TR, K), lambda r: (r, 0)),
            pl.BlockSpec((K, Cp), lambda r: (0, 0)),
            pl.BlockSpec((1, Cp), lambda r: (0, 0)),
        ],
        out_specs=pl.BlockSpec((TR, Cp), lambda r: (r, 0)),
        compiler_params=pltpu.CompilerParams(
            dimension_semantics=("parallel",)),
    )(patches_p, w2, bias)

    out = out_p[:R, :Cout].reshape(N, OH, OW, Cout)                # NHWC bf16
    if channels_last:
        return out
    return jnp.transpose(out, (0, 3, 1, 2))                        # NCHW (PyTorch layout)


# ----------------------------------------------------------------------------
# Deterministic parameter init (mirrors Network.__init__; bias not needed)
# ----------------------------------------------------------------------------
def init_params(key):
    Cout, Cin, KH, KW = 64, 3, 7, 7
    fan_in = Cin * KH * KW
    # kaiming_normal_: std = sqrt(2 / fan_in)
    conv_w = jax.random.normal(key, (Cout, Cin, KH, KW), jnp.float32) * jnp.sqrt(
        2.0 / fan_in)
    return conv_w


if __name__ == "__main__":
    key = jax.random.PRNGKey(0)
    pkey, xkey = jax.random.split(key)
    conv_w = init_params(pkey)

    # Small input consistent with the module: NCHW, 3 input channels.
    x = jax.random.normal(xkey, (2, 3, 16, 16), jnp.float32)

    # Fast path: NHWC bf16
    out = network_forward(x, conv_w)
    out = jax.block_until_ready(out)
    assert out.shape == (2, 10, 10, 64), out.shape
    assert bool(jnp.all(out >= 0.0))          # ReLU post-condition

    # PyTorch-layout path
    out_nchw = jax.block_until_ready(network_forward(x, conv_w, channels_last=False))
    assert out_nchw.shape == (2, 64, 10, 10), out_nchw.shape

    # f32 reference: conv -> training-mode BN (gamma=1, beta=0) -> ReLU
    ref_conv = jax.lax.conv_general_dilated(
        x, conv_w, window_strides=(1, 1), padding="VALID",
        dimension_numbers=("NCHW", "OIHW", "NCHW"))
    m = ref_conv.mean(axis=(0, 2, 3), keepdims=True)
    v = ref_conv.var(axis=(0, 2, 3), keepdims=True)
    ref = jnp.maximum((ref_conv - m) * jax.lax.rsqrt(v + _EPS), 0.0)
    ref_nhwc = jnp.transpose(ref, (0, 2, 3, 1))
    max_diff = float(jnp.max(jnp.abs(out.astype(jnp.float32) - ref_nhwc)))
    assert max_diff < 0.2, max_diff            # bf16-level tolerance

    print("KERNEL_OK")
</pallas_src>

<mosaic_0001>
module attributes {stable_mosaic.version = 11 : i64} {
  func.func @conv_stats_kernel(%arg0: i32, %arg1: i32, %arg2: memref<208x147xbf16, #tpu.memory_space<vmem>>, %arg3: memref<147x128xbf16, #tpu.memory_space<vmem>>, %arg4: memref<8x128xf32, #tpu.memory_space<vmem>>, %arg5: memref<8x128xf32, #tpu.memory_space<vmem>>) attributes {dimension_semantics = [#tpu.dimension_semantics<parallel>, #tpu.dimension_semantics<arbitrary>], iteration_bounds = array<i64: 1, 1>, scalar_prefetch = 0 : i64, scratch_operands = 0 : i64, tpu.core_type = #tpu.core_type<tc>, window_params = [{transform_indices = @transform_0, window_bounds = array<i64: 208, 147>}, {pipeline_mode = #tpu.pipeline_mode<synchronous>, transform_indices = @transform_1, window_bounds = array<i64: 147, 128>}, {transform_indices = @transform_2, window_bounds = array<i64: 8, 128>}, {transform_indices = @transform_3, window_bounds = array<i64: 8, 128>}]} {
    %c0_i32 = arith.constant 0 : i32
    %0 = arith.cmpi eq, %arg1, %c0_i32 : i32
    %1 = arith.extui %0 : i1 to i32
    %c0_i32_0 = arith.constant 0 : i32
    %2 = arith.cmpi ne, %1, %c0_i32_0 : i32
    scf.if %2 {
      %cst_14 = arith.constant 0.000000e+00 : f32
      %16 = vector.broadcast %cst_14 : f32 to vector<8x128xf32>
      %c0_15 = arith.constant 0 : index
      %c0_16 = arith.constant 0 : index
      %17 = vector.load %arg4[%c0_15, %c0_16] : memref<8x128xf32, #tpu.memory_space<vmem>>, vector<8x128xf32>
      tpu.vector_store %arg4[%c0_15, %c0_16], %16 {strides = array<i32>} : memref<8x128xf32, #tpu.memory_space<vmem>>, vector<8x128xf32>,
      %cst_17 = arith.constant 0.000000e+00 : f32
      %18 = vector.broadcast %cst_17 : f32 to vector<8x128xf32>
      %c0_18 = arith.constant 0 : index
      %c0_19 = arith.constant 0 : index
      %19 = vector.load %arg5[%c0_18, %c0_19] : memref<8x128xf32, #tpu.memory_space<vmem>>, vector<8x128xf32>
      tpu.vector_store %arg5[%c0_18, %c0_19], %18 {strides = array<i32>} : memref<8x128xf32, #tpu.memory_space<vmem>>, vector<8x128xf32>,
    } else {
    }
    %c0 = arith.constant 0 : index
    %c0_1 = arith.constant 0 : index
    %3 = vector.load %arg2[%c0, %c0_1] : memref<208x147xbf16, #tpu.memory_space<vmem>>, vector<208x147xbf16>
    %c0_2 = arith.constant 0 : index
    %c0_3 = arith.constant 0 : index
    %4 = vector.load %arg3[%c0_2, %c0_3] : memref<147x128xbf16, #tpu.memory_space<vmem>>, vector<147x128xbf16>
    %cst = arith.constant dense<0.000000e+00> : vector<208x128xf32>
    %5 = tpu.matmul %3, %4, %cst {dimension_numbers = #tpu.dot_dimension_numbers<[1], [0], [0], [1], [0, 0, 1, 1], [], []>} : vector<208x147xbf16>, vector<147x128xbf16>, vector<208x128xf32> -> vector<208x128xf32>
    %6 = vector.shape_cast %5 : vector<208x128xf32> to vector<26x8x128xf32>
    %c0_4 = arith.constant 0 : index
    %c0_5 = arith.constant 0 : index
    %7 = vector.load %arg4[%c0_4, %c0_5] : memref<8x128xf32, #tpu.memory_space<vmem>>, vector<8x128xf32>
    %cst_6 = arith.constant dense<0.000000e+00> : vector<8x128xf32>
    %8 = vector.multi_reduction <add>, %6, %cst_6 [0] : vector<26x8x128xf32> to vector<8x128xf32>
    %9 = arith.addf %7, %8 : vector<8x128xf32>
    %c0_7 = arith.constant 0 : index
    %c0_8 = arith.constant 0 : index
    %10 = vector.load %arg4[%c0_7, %c0_8] : memref<8x128xf32, #tpu.memory_space<vmem>>, vector<8x128xf32>
    tpu.vector_store %arg4[%c0_7, %c0_8], %9 {strides = array<i32>} : memref<8x128xf32, #tpu.memory_space<vmem>>, vector<8x128xf32>,
    %c0_9 = arith.constant 0 : index
    %c0_10 = arith.constant 0 : index
    %11 = vector.load %arg5[%c0_9, %c0_10] : memref<8x128xf32, #tpu.memory_space<vmem>>, vector<8x128xf32>
    %12 = arith.mulf %6, %6 : vector<26x8x128xf32>
    %cst_11 = arith.constant dense<0.000000e+00> : vector<8x128xf32>
    %13 = vector.multi_reduction <add>, %12, %cst_11 [0] : vector<26x8x128xf32> to vector<8x128xf32>
    %14 = arith.addf %11, %13 : vector<8x128xf32>
    %c0_12 = arith.constant 0 : index
    %c0_13 = arith.constant 0 : index
    %15 = vector.load %arg5[%c0_12, %c0_13] : memref<8x128xf32, #tpu.memory_space<vmem>>, vector<8x128xf32>
    tpu.vector_store %arg5[%c0_12, %c0_13], %14 {strides = array<i32>} : memref<8x128xf32, #tpu.memory_space<vmem>>, vector<8x128xf32>,
    return
  }
  func.func @transform_0(%arg0: i32, %arg1: i32) -> (i32, i32) {
    %c1_i32 = arith.constant 1 : i32
    %0 = arith.muli %arg0, %c1_i32 : i32
    %1 = arith.addi %0, %arg1 : i32
    %c0_i32 = arith.constant 0 : i32
    %c0_i32_0 = arith.constant 0 : i32
    return %1, %c0_i32 : i32, i32
  }
  func.func @transform_1(%arg0: i32, %arg1: i32) -> (i32, i32) {
    %c0_i32 = arith.constant 0 : i32
    %c0_i32_0 = arith.constant 0 : i32
    %c0_i32_1 = arith.constant 0 : i32
    return %c0_i32, %c0_i32_0 : i32, i32
  }
  func.func @transform_2(%arg0: i32, %arg1: i32) -> (i32, i32) {
    %c0_i32 = arith.constant 0 : i32
    %c0_i32_0 = arith.constant 0 : i32
    return %arg0, %c0_i32 : i32, i32
  }
  func.func @transform_3(%arg0: i32, %arg1: i32) -> (i32, i32) {
    %c0_i32 = arith.constant 0 : i32
    %c0_i32_0 = arith.constant 0 : i32
    return %arg0, %c0_i32 : i32, i32
  }
}

module attributes {stable_mosaic.version = 11 : i64} {
  func.func @conv_bn_relu_kernel(%arg0: i32, %arg1: memref<208x147xbf16, #tpu.memory_space<vmem>>, %arg2: memref<147x128xbf16, #tpu.memory_space<vmem>>, %arg3: memref<1x128xf32, #tpu.memory_space<vmem>>, %arg4: memref<208x128xbf16, #tpu.memory_space<vmem>>) attributes {dimension_semantics = [#tpu.dimension_semantics<parallel>], iteration_bounds = array<i64: 1>, scalar_prefetch = 0 : i64, scratch_operands = 0 : i64, tpu.core_type = #tpu.core_type<tc>, window_params = [{transform_indices = @transform_0, window_bounds = array<i64: 208, 147>}, {pipeline_mode = #tpu.pipeline_mode<synchronous>, transform_indices = @transform_1, window_bounds = array<i64: 147, 128>}, {pipeline_mode = #tpu.pipeline_mode<synchronous>, transform_indices = @transform_2, window_bounds = array<i64: 1, 128>}, {transform_indices = @transform_3, window_bounds = array<i64: 208, 128>}]} {
    %c0 = arith.constant 0 : index
    %c0_0 = arith.constant 0 : index
    %0 = vector.load %arg1[%c0, %c0_0] : memref<208x147xbf16, #tpu.memory_space<vmem>>, vector<208x147xbf16>
    %c0_1 = arith.constant 0 : index
    %c0_2 = arith.constant 0 : index
    %1 = vector.load %arg2[%c0_1, %c0_2] : memref<147x128xbf16, #tpu.memory_space<vmem>>, vector<147x128xbf16>
    %cst = arith.constant dense<0.000000e+00> : vector<208x128xf32>
    %2 = tpu.matmul %0, %1, %cst {dimension_numbers = #tpu.dot_dimension_numbers<[1], [0], [0], [1], [0, 0, 1, 1], [], []>} : vector<208x147xbf16>, vector<147x128xbf16>, vector<208x128xf32> -> vector<208x128xf32>
    %c0_3 = arith.constant 0 : index
    %c0_4 = arith.constant 0 : index
    %3 = vector.load %arg3[%c0_3, %c0_4] : memref<1x128xf32, #tpu.memory_space<vmem>>, vector<1x128xf32>
    %4 = vector.broadcast %3 : vector<1x128xf32> to vector<208x128xf32>
    %5 = arith.subf %2, %4 : vector<208x128xf32>
    %cst_5 = arith.constant 0.000000e+00 : f32
    %6 = vector.broadcast %cst_5 : f32 to vector<208x128xf32>
    %7 = arith.maximumf %5, %6 : vector<208x128xf32>
    %8 = arith.truncf %7 : vector<208x128xf32> to vector<208x128xbf16>
    %c0_6 = arith.constant 0 : index
    %c0_7 = arith.constant 0 : index
    %9 = vector.load %arg4[%c0_6, %c0_7] : memref<208x128xbf16, #tpu.memory_space<vmem>>, vector<208x128xbf16>
    tpu.vector_store %arg4[%c0_6, %c0_7], %8 {strides = array<i32>} : memref<208x128xbf16, #tpu.memory_space<vmem>>, vector<208x128xbf16>,
    return
  }
  func.func @transform_0(%arg0: i32) -> (i32, i32) {
    %c0_i32 = arith.constant 0 : i32
    %c0_i32_0 = arith.constant 0 : i32
    return %arg0, %c0_i32 : i32, i32
  }
  func.func @transform_1(%arg0: i32) -> (i32, i32) {
    %c0_i32 = arith.constant 0 : i32
    %c0_i32_0 = arith.constant 0 : i32
    %c0_i32_1 = arith.constant 0 : i32
    return %c0_i32, %c0_i32_0 : i32, i32
  }
  func.func @transform_2(%arg0: i32) -> (i32, i32) {
    %c0_i32 = arith.constant 0 : i32
    %c0_i32_0 = arith.constant 0 : i32
    %c0_i32_1 = arith.constant 0 : i32
    return %c0_i32, %c0_i32_0 : i32, i32
  }
  func.func @transform_3(%arg0: i32) -> (i32, i32) {
    %c0_i32 = arith.constant 0 : i32
    %c0_i32_0 = arith.constant 0 : i32
    return %arg0, %c0_i32 : i32, i32
  }
}

</mosaic_0001>

<llo_original>
// kernel: network_forward.2
$region0: #{network_forward.2}
  #allocation0 [shape = 'u32[]', space=smem, size = 0x4, offset = 0x4, fixed_abs, tag = 'smem constant byte address 0x4 - core index']
  #allocation1 [shape = 'u32[144,128]{1,0:T(1,128)}', space=vmem, size = 0x12000, scoped, tag = 'internal scratch']
  %s0 = inlined_call_operand.vmem [shape: bf16[208,147], index: 0, kind: input, shape index: {}]
  %s1 = inlined_call_operand.vmem [shape: bf16[147,128], index: 1, kind: input, shape index: {}]
  %s2 = inlined_call_operand.vmem [shape: f32[8,128], index: 2, kind: output, shape index: {0}]
  %s3 = inlined_call_operand.vmem [shape: f32[8,128], index: 3, kind: output, shape index: {1}]
  %4 = xla_tuple %s2, %s3
  %s5 = sld [smem:[#allocation0]]
  $region30: #{network_forward.2} parent=0
    _
  %s7 = ssub.s32 1, %s5
  %s8 = scalar_select 0, %s7, %s5
  // Predicated region
  $region2: #{network_forward.2} parent=0 // pred_check
    _
  $region3: #{network_forward.2} parent=0 // pred_check_branch
    %10 = sbr.rel (0) target = $region5
  $region4: #{network_forward.2} parent=0 // pred_region
    %s11 = sadd.s32 0, 0
    %s12 = smul.u32 26, %s11
    %p13 = scmp.lt.s32.totalorder %s12, 25
    %s14 = scalar_select %p13, %s12, 25
    %s15 = smul.addr %s14, 2
    %s16 = smul.addr %s15, 4
    %s17 = scalar_lea.vmem %s0, %s16
    %s18 = sadd.s32 0, 0
    %s19 = smul.u32 26, %s18
  $region5: #{network_forward.2} parent=0 // pred_fallthru
    _
  // Predicated region
  $region6: #{network_forward.2} parent=0 // pred_check
    _
  $region7: #{network_forward.2} parent=0 // pred_check_branch
    %21 = sbr.rel (0) target = $region9
  $region8: #{network_forward.2} parent=0 // pred_region
    _
  $region9: #{network_forward.2} parent=0 // pred_fallthru
    _
  %s22 = sadd.s32 0, 0
  %s23 = smul.u32 26, %s22
  %p24 = scmp.lt.s32.totalorder %s23, 25
  %s25 = scalar_select %p24, %s23, 25
  %s26 = smul.addr %s25, 2
  %s27 = smul.addr %s26, 4
  %s28 = scalar_lea.vmem %s0, %s27
  %s29 = sadd.s32 0, 0
  %s30 = smul.u32 26, %s29
  %p31 = scmp.lt.s32.totalorder %s30, 25
  %s32 = scalar_select %p31, %s30, 25
  %s33 = smul.addr %s32, 2
  %s34 = smul.addr %s33, 4
  %s35 = scalar_lea.vmem %s0, %s34
  %s36 = sadd.s32 0, 0
  %s37 = smul.u32 26, %s36
  %p39 = scmp.eq.s32.totalorder 0, 0
  // Predicated region
  $region10: #{network_forward.2} parent=0 // pred_check
    %p40 = pneg %p39
  $region11: #{network_forward.2} parent=0 // pred_check_branch
    %42 = sbr.rel (%p40) target = $region13
  $region12: #{network_forward.2} parent=0 // pred_region
    %43 = vst [vmem:[%s2] sm:$0xff] 0.0
    %44 = vst [vmem:[%s3] sm:$0xff] 0.0
  $region13: #{network_forward.2} parent=0 // pred_fallthru
    _
  %v45 = vld [vmem:[%s35] sm:$0xff]
  %v46 = vld [vmem:[%s35 + $0x8] sm:$0xff]
  %v47 = vld [vmem:[%s35 + $0x10] sm:$0xff]
  %v48 = vld [vmem:[%s35 + $0x18] sm:$0xff]
  %v49 = vld [vmem:[%s35 + $0x20] sm:$0xff]
  %v50 = vld [vmem:[%s35 + $0x28] sm:$0xff]
  %v51 = vld [vmem:[%s35 + $0x30] sm:$0xff]
  %v52 = vld [vmem:[%s35 + $0x38] sm:$0xff]
  %v53 = vld [vmem:[%s35 + $0x40] sm:$0xff]
  %v54 = vld [vmem:[%s35 + $0x48] sm:$0xff]
  %v55 = vld [vmem:[%s35 + $0x50] sm:$0xff]
  %v56 = vld [vmem:[%s35 + $0x58] sm:$0xff]
  %v57 = vld [vmem:[%s35 + $0x60] sm:$0xff]
  %v58 = vld [vmem:[%s35 + $0x68] sm:$0xff]
  %v59 = vld [vmem:[%s35 + $0x70] sm:$0xff]
  %v60 = vld [vmem:[%s35 + $0x78] sm:$0xff]
  %v61 = vld [vmem:[%s35 + $0x80] sm:$0xff]
  %v62 = vld [vmem:[%s35 + $0x88] sm:$0xff]
  %v63 = vld [vmem:[%s35 + $0x90] sm:$0xff]
  %v64 = vld [vmem:[%s35 + $0x98] sm:$0xff]
  %v65 = vld [vmem:[%s35 + $0xa0] sm:$0xff]
  %v66 = vld [vmem:[%s35 + $0xa8] sm:$0xff]
  %v67 = vld [vmem:[%s35 + $0xb0] sm:$0xff]
  %v68 = vld [vmem:[%s35 + $0xb8] sm:$0xff]
  %v69 = vld [vmem:[%s35 + $0xc0] sm:$0xff]
  %v70 = vld [vmem:[%s35 + $0xc8] sm:$0xff]
  %v71 = vld [vmem:[%s1] sm:$0xf]
  %v72 = vld [vmem:[%s1 + $0x4] sm:$0xf]
  %v73 = vld [vmem:[%s1 + $0x8] sm:$0xf]
  %v74 = vld [vmem:[%s1 + $0xc] sm:$0xf]
  %v75 = vld [vmem:[%s1 + $0x10] sm:$0xf]
  %v76 = vld [vmem:[%s1 + $0x14] sm:$0xf]
  %v77 = vld [vmem:[%s1 + $0x18] sm:$0xf]
  %v78 = vld [vmem:[%s1 + $0x1c] sm:$0xf]
  %v79 = vld [vmem:[%s1 + $0x20] sm:$0xf]
  %v80 = vld [vmem:[%s1 + $0x24] sm:$0xf]
  %v81 = vld [vmem:[%s1 + $0x28] sm:$0xf]
  %v82 = vld [vmem:[%s1 + $0x2c] sm:$0xf]
  %v83 = vld [vmem:[%s1 + $0x30] sm:$0xf]
  %v84 = vld [vmem:[%s1 + $0x34] sm:$0xf]
  %v85 = vld [vmem:[%s1 + $0x38] sm:$0xf]
  %v86 = vld [vmem:[%s1 + $0x3c] sm:$0xf]
  %v87 = vld [vmem:[%s1 + $0x40] sm:$0xf]
  %v88 = vld [vmem:[%s1 + $0x44] sm:$0xf]
  %v89 = vld [vmem:[%s1 + $0x48] sm:$0x3]
  %v116 = vunpack.c.l.b16 %v45
  %v117 = vunpack.c.h.b16 %v45
  %v118 = vunpack.c.l.b16 %v46
  %v119 = vunpack.c.h.b16 %v46
  %v120 = vunpack.c.l.b16 %v47
  %v121 = vunpack.c.h.b16 %v47
  %v122 = vunpack.c.l.b16 %v48
  %v123 = vunpack.c.h.b16 %v48
  %v124 = vunpack.c.l.b16 %v49
  %v125 = vunpack.c.h.b16 %v49
  %v126 = vunpack.c.l.b16 %v50
  %v127 = vunpack.c.h.b16 %v50
  %v128 = vunpack.c.l.b16 %v51
  %v129 = vunpack.c.h.b16 %v51
  %v130 = vunpack.c.l.b16 %v52
  %v131 = vunpack.c.h.b16 %v52
  %v132 = vunpack.c.l.b16 %v53
  %v133 = vunpack.c.h.b16 %v53
  %v134 = vunpack.c.l.b16 %v54
  %v135 = vunpack.c.h.b16 %v54
  %v136 = vunpack.c.l.b16 %v55
  %v137 = vunpack.c.h.b16 %v55
  %v138 = vunpack.c.l.b16 %v56
  %v139 = vunpack.c.h.b16 %v56
  %v140 = vunpack.c.l.b16 %v57
  %v141 = vunpack.c.h.b16 %v57
  %v142 = vunpack.c.l.b16 %v58
  %v143 = vunpack.c.h.b16 %v58
  %v144 = vunpack.c.l.b16 %v59
  %v145 = vunpack.c.h.b16 %v59
  %v146 = vunpack.c.l.b16 %v60
  %v147 = vunpack.c.h.b16 %v60
  %v148 = vunpack.c.l.b16 %v61
  %v149 = vunpack.c.h.b16 %v61
  %v150 = vunpack.c.l.b16 %v62
  %v151 = vunpack.c.h.b16 %v62
  %v152 = vunpack.c.l.b16 %v63
  %v153 = vunpack.c.h.b16 %v63
  %v154 = vunpack.c.l.b16 %v64
  %v155 = vunpack.c.h.b16 %v64
  %v156 = vunpack.c.l.b16 %v65
  %v157 = vunpack.c.h.b16 %v65
  %v158 = vunpack.c.l.b16 %v66
  %v159 = vunpack.c.h.b16 %v66
  %v160 = vunpack.c.l.b16 %v67
  %v161 = vunpack.c.h.b16 %v67
  %v162 = vunpack.c.l.b16 %v68
  %v163 = vunpack.c.h.b16 %v68
  %v164 = vunpack.c.l.b16 %v69
  %v165 = vunpack.c.h.b16 %v69
  %v166 = vunpack.c.l.b16 %v70
  %v167 = vunpack.c.h.b16 %v70
  %v168 = vpack.c.b16 %v118, %v116
  %v169 = vpack.c.b16 %v119, %v117
  %v170 = vpack.c.b16 %v122, %v120
  %v171 = vpack.c.b16 %v123, %v121
  %v172 = vpack.c.b16 %v126, %v124
  %v173 = vpack.c.b16 %v127, %v125
  %v174 = vpack.c.b16 %v130, %v128
  %v175 = vpack.c.b16 %v131, %v129
  %v176 = vpack.c.b16 %v134, %v132
  %v177 = vpack.c.b16 %v135, %v133
  %v178 = vpack.c.b16 %v138, %v136
  %v179 = vpack.c.b16 %v139, %v137
  %v180 = vpack.c.b16 %v142, %v140
  %v181 = vpack.c.b16 %v143, %v141
  %v182 = vpack.c.b16 %v146, %v144
  %v183 = vpack.c.b16 %v147, %v145
  %v184 = vpack.c.b16 %v150, %v148
  %v185 = vpack.c.b16 %v151, %v149
  %v186 = vpack.c.b16 %v154, %v152
  %v187 = vpack.c.b16 %v155, %v153
  %v188 = vpack.c.b16 %v158, %v156
  %v189 = vpack.c.b16 %v159, %v157
  %v190 = vpack.c.b16 %v162, %v160
  %v191 = vpack.c.b16 %v163, %v161
  %v192 = vpack.c.b16 %v166, %v164
  %v193 = vpack.c.b16 %v167, %v165
  %v226 = vunpack.c.l.b16 %v71
  %v227 = vunpack.c.l.b16 %v72
  %v228 = vunpack.c.l.b16 %v73
  %v229 = vunpack.c.l.b16 %v74
  %v230 = vunpack.c.l.b16 %v75
  %v231 = vunpack.c.l.b16 %v76
  %v232 = vunpack.c.l.b16 %v77
  %v233 = vunpack.c.l.b16 %v78
  %v234 = vunpack.c.l.b16 %v79
  %v235 = vunpack.c.l.b16 %v80
  %v236 = vunpack.c.l.b16 %v81
  %v237 = vunpack.c.l.b16 %v82
  %v238 = vunpack.c.l.b16 %v83
  %v239 = vunpack.c.l.b16 %v84
  %v240 = vunpack.c.l.b16 %v85
  %v241 = vunpack.c.l.b16 %v86
  %v242 = vunpack.c.l.b16 %v87
  %v243 = vunpack.c.l.b16 %v88
  %v244 = vunpack.c.l.b16 %v89
  %v245 = vpack.c.b16 %v227, %v226
  %v246 = vpack.c.b16 %v229, %v228
  %v247 = vpack.c.b16 %v231, %v230
  %v248 = vpack.c.b16 %v233, %v232
  %v249 = vpack.c.b16 %v235, %v234
  %v250 = vpack.c.b16 %v237, %v236
  %v251 = vpack.c.b16 %v239, %v238
  %v252 = vpack.c.b16 %v241, %v240
  %v253 = vpack.c.b16 %v243, %v242
  %v254 = vpack.c.b16 %v244, %v244
  %vm264 = vcmask 154624
  %v266 = vsel %vm264, %v169, 0
  %v269 = vsel %vm264, %v171, 0
  %v272 = vsel %vm264, %v173, 0
  %v275 = vsel %vm264, %v175, 0
  %v278 = vsel %vm264, %v177, 0
  %v281 = vsel %vm264, %v179, 0
  %v284 = vsel %vm264, %v181, 0
  %v287 = vsel %vm264, %v183, 0
  %v290 = vsel %vm264, %v185, 0
  %v293 = vsel %vm264, %v187, 0
  %v296 = vsel %vm264, %v189, 0
  %v299 = vsel %vm264, %v191, 0
  %v302 = vsel %vm264, %v193, 0
  %vm304 = vcmask 1040384
  %vm305 = vcmask 1041408
  %v306 = vsel %vm304, 4294967295, 65535
  %v307 = vsel %vm305, %v306, 0
  %v309 = vand.u32 %v254, %v307
  %311 = vmatprep.subr.bf16.mxu0 0
  %312 = vmatpush1.bf16.msra.mxu0 %v245
  %313 = vmatprep.subr.bf16.mxu0 0
  %314 = vmatpush1.bf16.msra.mxu0 %v246
  %315 = vmatprep.subr.bf16.mxu0 0
  %316 = vmatpush1.bf16.msra.mxu0 %v247
  %317 = vmatprep.subr.bf16.mxu0 0
  %318 = vmatpush1.bf16.msra.mxu0 %v248
  %319 = vmatprep.subr.bf16.mxu0 0
  %320 = vmatpush1.bf16.msra.mxu0 %v249
  %321 = vmatprep.subr.bf16.mxu0 0
  %322 = vmatpush1.bf16.msra.mxu0 %v250
  %323 = vmatprep.subr.bf16.mxu0 0
  %324 = vmatpush1.bf16.msra.mxu0 %v251
  %325 = vmatprep.subr.bf16.mxu0 0
  %326 = vmatpush1.bf16.msra.mxu0 %v252
  %327 = vmatprep.subr.bf16.mxu0 0
  %328 = vmatpush1.bf16.msra.mxu0 %v253
  %329 = vmatprep.subr.bf16.mxu0 0
  %330 = vmatpush1.bf16.msra.mxu0 %v309
  %331 = vmatprep.subr.bf16.mxu0 0
  %332 = vmatpush1.bf16.msra.mxu0 0
  %333 = vmatprep.subr.bf16.mxu0 0
  %334 = vmatpush1.bf16.msra.mxu0 0
  %335 = vmatprep.subr.bf16.mxu0 0
  %336 = vmatpush1.bf16.msra.mxu0 0
  %337 = vmatprep.subr.bf16.mxu0 0
  %338 = vmatpush1.bf16.msra.mxu0 0
  %339 = vmatprep.subr.bf16.mxu0 0
  %340 = vmatpush1.bf16.msra.mxu0 0
  %341 = vmatprep.subr.bf16.mxu0 0
  %342 = vmatpush1.bf16.msra.mxu0 0
  %343 = vmatprep.mubr.bf16.mxu0 %v266
  %344 = vmatmul.mubr.bf16.gmra.mrb[0].mxu0 %v168
  %v345 = vpop.f32.mrb[0].mxu0
  %v346 = vadd.f32 0.0, %v345
  %v347 = vpop.f32.mrb[0].mxu0
  %v348 = vpop.f32.mrb[0].mxu0
  %v349 = vadd.f32 0.0, %v348
  %v350 = vpop.f32.mrb[0].mxu0
  %351 = vmatprep.mubr.bf16.mxu0 %v269
  %352 = vmatmul.mubr.bf16.gmra.mrb[0].mxu0 %v170
  %v353 = vpop.f32.mrb[0].mxu0
  %v354 = vadd.f32 0.0, %v353
  %v355 = vpop.f32.mrb[0].mxu0
  %v356 = vpop.f32.mrb[0].mxu0
  %v357 = vadd.f32 0.0, %v356
  %v358 = vpop.f32.mrb[0].mxu0
  %359 = vmatprep.mubr.bf16.mxu0 %v272
  %360 = vmatmul.mubr.bf16.gmra.mrb[0].mxu0 %v172
  %v361 = vpop.f32.mrb[0].mxu0
  %v362 = vadd.f32 0.0, %v361
  %v363 = vpop.f32.mrb[0].mxu0
  %v364 = vpop.f32.mrb[0].mxu0
  %v365 = vadd.f32 0.0, %v364
  %v366 = vpop.f32.mrb[0].mxu0
  %367 = vmatprep.mubr.bf16.mxu0 %v275
  %368 = vmatmul.mubr.bf16.gmra.mrb[0].mxu0 %v174
  %v369 = vpop.f32.mrb[0].mxu0
  %v370 = vadd.f32 0.0, %v369
  %v371 = vpop.f32.mrb[0].mxu0
  %v372 = vpop.f32.mrb[0].mxu0
  %v373 = vadd.f32 0.0, %v372
  %v374 = vpop.f32.mrb[0].mxu0
  %375 = vmatprep.mubr.bf16.mxu0 %v278
  %376 = vmatmul.mubr.bf16.gmra.mrb[0].mxu0 %v176
  %v377 = vpop.f32.mrb[0].mxu0
  %v378 = vadd.f32 0.0, %v377
  %v379 = vpop.f32.mrb[0].mxu0
  %v380 = vpop.f32.mrb[0].mxu0
  %v381 = vadd.f32 0.0, %v380
  %v382 = vpop.f32.mrb[0].mxu0
  %383 = vmatprep.mubr.bf16.mxu0 %v281
  %384 = vmatmul.mubr.bf16.gmra.mrb[0].mxu0 %v178
  %v385 = vpop.f32.mrb[0].mxu0
  %v386 = vadd.f32 0.0, %v385
  %v387 = vpop.f32.mrb[0].mxu0
  %v388 = vpop.f32.mrb[0].mxu0
  %v389 = vadd.f32 0.0, %v388
  %v390 = vpop.f32.mrb[0].mxu0
  %391 = vmatprep.mubr.bf16.mxu0 %v284
  %392 = vmatmul.mubr.bf16.gmra.mrb[0].mxu0 %v180
  %v393 = vpop.f32.mrb[0].mxu0
  %v394 = vadd.f32 0.0, %v393
  %v395 = vpop.f32.mrb[0].mxu0
  %v396 = vpop.f32.mrb[0].mxu0
  %v397 = vadd.f32 0.0, %v396
  %v398 = vpop.f32.mrb[0].mxu0
  %399 = vmatprep.mubr.bf16.mxu0 %v287
  %400 = vmatmul.mubr.bf16.gmra.mrb[0].mxu0 %v182
  %v401 = vpop.f32.mrb[0].mxu0
  %v402 = vadd.f32 0.0, %v401
  %v403 = vpop.f32.mrb[0].mxu0
  %v404 = vpop.f32.mrb[0].mxu0
  %v405 = vadd.f32 0.0, %v404
  %v406 = vpop.f32.mrb[0].mxu0
  %407 = vmatprep.mubr.bf16.mxu0 %v290
  %408 = vmatmul.mubr.bf16.gmra.mrb[0].mxu0 %v184
  %v409 = vpop.f32.mrb[0].mxu0
  %v410 = vadd.f32 0.0, %v409
  %v411 = vpop.f32.mrb[0].mxu0
  %v412 = vpop.f32.mrb[0].mxu0
  %v413 = vadd.f32 0.0, %v412
  %v414 = vpop.f32.mrb[0].mxu0
  %415 = vmatprep.mubr.bf16.mxu0 %v293
  %416 = vmatmul.mubr.bf16.gmra.mrb[0].mxu0 %v186
  %v417 = vpop.f32.mrb[0].mxu0
  %v418 = vadd.f32 0.0, %v417
  %v419 = vpop.f32.mrb[0].mxu0
  %v420 = vpop.f32.mrb[0].mxu0
  %v421 = vadd.f32 0.0, %v420
  %v422 = vpop.f32.mrb[0].mxu0
  %423 = vmatprep.mubr.bf16.mxu0 %v296
  %424 = vmatmul.mubr.bf16.gmra.mrb[0].mxu0 %v188
  %v425 = vpop.f32.mrb[0].mxu0
  %v426 = vadd.f32 0.0, %v425
  %v427 = vpop.f32.mrb[0].mxu0
  %v428 = vpop.f32.mrb[0].mxu0
  %v429 = vadd.f32 0.0, %v428
  %v430 = vpop.f32.mrb[0].mxu0
  %431 = vmatprep.mubr.bf16.mxu0 %v299
  %432 = vmatmul.mubr.bf16.gmra.mrb[0].mxu0 %v190
  %v433 = vpop.f32.mrb[0].mxu0
  %v434 = vadd.f32 0.0, %v433
  %v435 = vpop.f32.mrb[0].mxu0
  %v436 = vpop.f32.mrb[0].mxu0
  %v437 = vadd.f32 0.0, %v436
  %v438 = vpop.f32.mrb[0].mxu0
  %439 = vmatprep.mubr.bf16.mxu0 %v302
  %440 = vmatmul.mubr.bf16.gmra.mrb[0].mxu0 %v192
  %v441 = vpop.f32.mrb[0].mxu0
  %v442 = vadd.f32 0.0, %v441
  %v443 = vpop.f32.mrb[0].mxu0
  %v444 = vpop.f32.mrb[0].mxu0
  %v445 = vadd.f32 0.0, %v444
  %v446 = vpop.f32.mrb[0].mxu0
  %447 = vdwg.mxu0
  %v448 = vld [vmem:[%s2] sm:$0xff]
  %v449 = vadd.f32 %v346, %v349
  %v450 = vadd.f32 %v449, %v354
  %v451 = vadd.f32 %v450, %v357
  %v452 = vadd.f32 %v451, %v362
  %v453 = vadd.f32 %v452, %v365
  %v454 = vadd.f32 %v453, %v370
  %v455 = vadd.f32 %v454, %v373
  %v456 = vadd.f32 %v455, %v378
  %v457 = vadd.f32 %v456, %v381
  %v458 = vadd.f32 %v457, %v386
  %v459 = vadd.f32 %v458, %v389
  %v460 = vadd.f32 %v459, %v394
  %v461 = vadd.f32 %v460, %v397
  %v462 = vadd.f32 %v461, %v402
  %v463 = vadd.f32 %v462, %v405
  %v464 = vadd.f32 %v463, %v410
  %v465 = vadd.f32 %v464, %v413
  %v466 = vadd.f32 %v465, %v418
  %v467 = vadd.f32 %v466, %v421
  %v468 = vadd.f32 %v467, %v426
  %v469 = vadd.f32 %v468, %v429
  %v470 = vadd.f32 %v469, %v434
  %v471 = vadd.f32 %v470, %v437
  %v472 = vadd.f32 %v471, %v442
  %v473 = vadd.f32 %v472, %v445
  %v474 = vadd.f32 %v448, %v473
  %475 = vst [vmem:[%s2] sm:$0xff] %v474
  %v476 = vld [vmem:[%s3] sm:$0xff]
  %v477 = vmul.f32 %v346, %v346
  %v478 = vmul.f32 %v349, %v349
  %v479 = vmul.f32 %v354, %v354
  %v480 = vmul.f32 %v357, %v357
  %v481 = vmul.f32 %v362, %v362
  %v482 = vmul.f32 %v365, %v365
  %v483 = vmul.f32 %v370, %v370
  %v484 = vmul.f32 %v373, %v373
  %v485 = vmul.f32 %v378, %v378
  %v486 = vmul.f32 %v381, %v381
  %v487 = vmul.f32 %v386, %v386
  %v488 = vmul.f32 %v389, %v389
  %v489 = vmul.f32 %v394, %v394
  %v490 = vmul.f32 %v397, %v397
  %v491 = vmul.f32 %v402, %v402
  %v492 = vmul.f32 %v405, %v405
  %v493 = vmul.f32 %v410, %v410
  %v494 = vmul.f32 %v413, %v413
  %v495 = vmul.f32 %v418, %v418
  %v496 = vmul.f32 %v421, %v421
  %v497 = vmul.f32 %v426, %v426
  %v498 = vmul.f32 %v429, %v429
  %v499 = vmul.f32 %v434, %v434
  %v500 = vmul.f32 %v437, %v437
  %v501 = vmul.f32 %v442, %v442
  %v502 = vmul.f32 %v445, %v445
  %v503 = vadd.f32 %v477, %v478
  %v504 = vadd.f32 %v503, %v479
  %v505 = vadd.f32 %v504, %v480
  %v506 = vadd.f32 %v505, %v481
  %v507 = vadd.f32 %v506, %v482
  %v508 = vadd.f32 %v507, %v483
  %v509 = vadd.f32 %v508, %v484
  %v510 = vadd.f32 %v509, %v485
  %v511 = vadd.f32 %v510, %v486
  %v512 = vadd.f32 %v511, %v487
  %v513 = vadd.f32 %v512, %v488
  %v514 = vadd.f32 %v513, %v489
  %v515 = vadd.f32 %v514, %v490
  %v516 = vadd.f32 %v515, %v491
  %v517 = vadd.f32 %v516, %v492
  %v518 = vadd.f32 %v517, %v493
  %v519 = vadd.f32 %v518, %v494
  %v520 = vadd.f32 %v519, %v495
  %v521 = vadd.f32 %v520, %v496
  %v522 = vadd.f32 %v521, %v497
  %v523 = vadd.f32 %v522, %v498
  %v524 = vadd.f32 %v523, %v499
  %v525 = vadd.f32 %v524, %v500
  %v526 = vadd.f32 %v525, %v501
  %v527 = vadd.f32 %v526, %v502
  %v528 = vadd.f32 %v476, %v527
  %529 = vst [vmem:[%s3] sm:$0xff] %v528
  // Predicated region
  $region14: #{network_forward.2} parent=0 // pred_check
    _
  $region15: #{network_forward.2} parent=0 // pred_check_branch
    %531 = sbr.rel (0) target = $region17
  $region16: #{network_forward.2} parent=0 // pred_region
    _
  $region17: #{network_forward.2} parent=0 // pred_fallthru
    _
  // Predicated region
  $region18: #{network_forward.2} parent=0 // pred_check
    _
  $region19: #{network_forward.2} parent=0 // pred_check_branch
    %533 = sbr.rel (0) target = $region21
  $region20: #{network_forward.2} parent=0 // pred_region
    _
  $region21: #{network_forward.2} parent=0 // pred_fallthru
    _
  // Predicated region
  $region22: #{network_forward.2} parent=0 // pred_check
    _
  $region23: #{network_forward.2} parent=0 // pred_check_branch
    %535 = sbr.rel (0) target = $region25
  $region24: #{network_forward.2} parent=0 // pred_region
    _
  $region25: #{network_forward.2} parent=0 // pred_fallthru
    _
  // Predicated region
  $region26: #{network_forward.2} parent=0 // pred_check
    _
  $region27: #{network_forward.2} parent=0 // pred_check_branch
    %537 = sbr.rel (0) target = $region29
  $region28: #{network_forward.2} parent=0 // pred_region
    _
  $region29: #{network_forward.2} parent=0 // pred_fallthru
    _

// kernel: network_forward.3
$region0: #{network_forward.3}
  #allocation0 [shape = 'u32[]', space=smem, size = 0x4, offset = 0x4, fixed_abs, tag = 'smem constant byte address 0x4 - core index']
  #allocation1 [shape = 'u32[144,128]{1,0:T(1,128)}', space=vmem, size = 0x12000, scoped, tag = 'internal scratch']
  %s0 = inlined_call_operand.vmem [shape: bf16[208,147], index: 0, kind: input, shape index: {}]
  %s1 = inlined_call_operand.vmem [shape: bf16[147,128], index: 1, kind: input, shape index: {}]
  %s2 = inlined_call_operand.vmem [shape: f32[1,128], index: 2, kind: input, shape index: {}]
  %s3 = inlined_call_operand.vmem [shape: bf16[208,128], index: 3, kind: output, shape index: {}]
  %s4 = sld [smem:[#allocation0]]
  $region22: #{network_forward.3} parent=0
    _
  %s6 = ssub.s32 1, %s4
  %s7 = scalar_select 0, %s6, %s4
  // Predicated region
  $region2: #{network_forward.3} parent=0 // pred_check
    _
  $region3: #{network_forward.3} parent=0 // pred_check_branch
    %9 = sbr.rel (0) target = $region5
  $region4: #{network_forward.3} parent=0 // pred_region
    _
  $region5: #{network_forward.3} parent=0 // pred_fallthru
    _
  // Predicated region
  $region6: #{network_forward.3} parent=0 // pred_check
    _
  $region7: #{network_forward.3} parent=0 // pred_check_branch
    %11 = sbr.rel (0) target = $region9
  $region8: #{network_forward.3} parent=0 // pred_region
    _
  $region9: #{network_forward.3} parent=0 // pred_fallthru
    _
  // Predicated region
  $region10: #{network_forward.3} parent=0 // pred_check
    _
  $region11: #{network_forward.3} parent=0 // pred_check_branch
    %13 = sbr.rel (0) target = $region13
  $region12: #{network_forward.3} parent=0 // pred_region
    _
  $region13: #{network_forward.3} parent=0 // pred_fallthru
    _
  %v15 = vld [vmem:[%s0] sm:$0xff]
  %v16 = vld [vmem:[%s0 + $0x8] sm:$0xff]
  %v17 = vld [vmem:[%s0 + $0x10] sm:$0xff]
  %v18 = vld [vmem:[%s0 + $0x18] sm:$0xff]
  %v19 = vld [vmem:[%s0 + $0x20] sm:$0xff]
  %v20 = vld [vmem:[%s0 + $0x28] sm:$0xff]
  %v21 = vld [vmem:[%s0 + $0x30] sm:$0xff]
  %v22 = vld [vmem:[%s0 + $0x38] sm:$0xff]
  %v23 = vld [vmem:[%s0 + $0x40] sm:$0xff]
  %v24 = vld [vmem:[%s0 + $0x48] sm:$0xff]
  %v25 = vld [vmem:[%s0 + $0x50] sm:$0xff]
  %v26 = vld [vmem:[%s0 + $0x58] sm:$0xff]
  %v27 = vld [vmem:[%s0 + $0x60] sm:$0xff]
  %v28 = vld [vmem:[%s0 + $0x68] sm:$0xff]
  %v29 = vld [vmem:[%s0 + $0x70] sm:$0xff]
  %v30 = vld [vmem:[%s0 + $0x78] sm:$0xff]
  %v31 = vld [vmem:[%s0 + $0x80] sm:$0xff]
  %v32 = vld [vmem:[%s0 + $0x88] sm:$0xff]
  %v33 = vld [vmem:[%s0 + $0x90] sm:$0xff]
  %v34 = vld [vmem:[%s0 + $0x98] sm:$0xff]
  %v35 = vld [vmem:[%s0 + $0xa0] sm:$0xff]
  %v36 = vld [vmem:[%s0 + $0xa8] sm:$0xff]
  %v37 = vld [vmem:[%s0 + $0xb0] sm:$0xff]
  %v38 = vld [vmem:[%s0 + $0xb8] sm:$0xff]
  %v39 = vld [vmem:[%s0 + $0xc0] sm:$0xff]
  %v40 = vld [vmem:[%s0 + $0xc8] sm:$0xff]
  %v41 = vld [vmem:[%s1] sm:$0xf]
  %v42 = vld [vmem:[%s1 + $0x4] sm:$0xf]
  %v43 = vld [vmem:[%s1 + $0x8] sm:$0xf]
  %v44 = vld [vmem:[%s1 + $0xc] sm:$0xf]
  %v45 = vld [vmem:[%s1 + $0x10] sm:$0xf]
  %v46 = vld [vmem:[%s1 + $0x14] sm:$0xf]
  %v47 = vld [vmem:[%s1 + $0x18] sm:$0xf]
  %v48 = vld [vmem:[%s1 + $0x1c] sm:$0xf]
  %v49 = vld [vmem:[%s1 + $0x20] sm:$0xf]
  %v50 = vld [vmem:[%s1 + $0x24] sm:$0xf]
  %v51 = vld [vmem:[%s1 + $0x28] sm:$0xf]
  %v52 = vld [vmem:[%s1 + $0x2c] sm:$0xf]
  %v53 = vld [vmem:[%s1 + $0x30] sm:$0xf]
  %v54 = vld [vmem:[%s1 + $0x34] sm:$0xf]
  %v55 = vld [vmem:[%s1 + $0x38] sm:$0xf]
  %v56 = vld [vmem:[%s1 + $0x3c] sm:$0xf]
  %v57 = vld [vmem:[%s1 + $0x40] sm:$0xf]
  %v58 = vld [vmem:[%s1 + $0x44] sm:$0xf]
  %v59 = vld [vmem:[%s1 + $0x48] sm:$0x3]
  %v86 = vunpack.c.l.b16 %v15
  %v87 = vunpack.c.h.b16 %v15
  %v88 = vunpack.c.l.b16 %v16
  %v89 = vunpack.c.h.b16 %v16
  %v90 = vunpack.c.l.b16 %v17
  %v91 = vunpack.c.h.b16 %v17
  %v92 = vunpack.c.l.b16 %v18
  %v93 = vunpack.c.h.b16 %v18
  %v94 = vunpack.c.l.b16 %v19
  %v95 = vunpack.c.h.b16 %v19
  %v96 = vunpack.c.l.b16 %v20
  %v97 = vunpack.c.h.b16 %v20
  %v98 = vunpack.c.l.b16 %v21
  %v99 = vunpack.c.h.b16 %v21
  %v100 = vunpack.c.l.b16 %v22
  %v101 = vunpack.c.h.b16 %v22
  %v102 = vunpack.c.l.b16 %v23
  %v103 = vunpack.c.h.b16 %v23
  %v104 = vunpack.c.l.b16 %v24
  %v105 = vunpack.c.h.b16 %v24
  %v106 = vunpack.c.l.b16 %v25
  %v107 = vunpack.c.h.b16 %v25
  %v108 = vunpack.c.l.b16 %v26
  %v109 = vunpack.c.h.b16 %v26
  %v110 = vunpack.c.l.b16 %v27
  %v111 = vunpack.c.h.b16 %v27
  %v112 = vunpack.c.l.b16 %v28
  %v113 = vunpack.c.h.b16 %v28
  %v114 = vunpack.c.l.b16 %v29
  %v115 = vunpack.c.h.b16 %v29
  %v116 = vunpack.c.l.b16 %v30
  %v117 = vunpack.c.h.b16 %v30
  %v118 = vunpack.c.l.b16 %v31
  %v119 = vunpack.c.h.b16 %v31
  %v120 = vunpack.c.l.b16 %v32
  %v121 = vunpack.c.h.b16 %v32
  %v122 = vunpack.c.l.b16 %v33
  %v123 = vunpack.c.h.b16 %v33
  %v124 = vunpack.c.l.b16 %v34
  %v125 = vunpack.c.h.b16 %v34
  %v126 = vunpack.c.l.b16 %v35
  %v127 = vunpack.c.h.b16 %v35
  %v128 = vunpack.c.l.b16 %v36
  %v129 = vunpack.c.h.b16 %v36
  %v130 = vunpack.c.l.b16 %v37
  %v131 = vunpack.c.h.b16 %v37
  %v132 = vunpack.c.l.b16 %v38
  %v133 = vunpack.c.h.b16 %v38
  %v134 = vunpack.c.l.b16 %v39
  %v135 = vunpack.c.h.b16 %v39
  %v136 = vunpack.c.l.b16 %v40
  %v137 = vunpack.c.h.b16 %v40
  %v138 = vpack.c.b16 %v88, %v86
  %v139 = vpack.c.b16 %v89, %v87
  %v140 = vpack.c.b16 %v92, %v90
  %v141 = vpack.c.b16 %v93, %v91
  %v142 = vpack.c.b16 %v96, %v94
  %v143 = vpack.c.b16 %v97, %v95
  %v144 = vpack.c.b16 %v100, %v98
  %v145 = vpack.c.b16 %v101, %v99
  %v146 = vpack.c.b16 %v104, %v102
  %v147 = vpack.c.b16 %v105, %v103
  %v148 = vpack.c.b16 %v108, %v106
  %v149 = vpack.c.b16 %v109, %v107
  %v150 = vpack.c.b16 %v112, %v110
  %v151 = vpack.c.b16 %v113, %v111
  %v152 = vpack.c.b16 %v116, %v114
  %v153 = vpack.c.b16 %v117, %v115
  %v154 = vpack.c.b16 %v120, %v118
  %v155 = vpack.c.b16 %v121, %v119
  %v156 = vpack.c.b16 %v124, %v122
  %v157 = vpack.c.b16 %v125, %v123
  %v158 = vpack.c.b16 %v128, %v126
  %v159 = vpack.c.b16 %v129, %v127
  %v160 = vpack.c.b16 %v132, %v130
  %v161 = vpack.c.b16 %v133, %v131
  %v162 = vpack.c.b16 %v136, %v134
  %v163 = vpack.c.b16 %v137, %v135
  %v196 = vunpack.c.l.b16 %v41
  %v197 = vunpack.c.l.b16 %v42
  %v198 = vunpack.c.l.b16 %v43
  %v199 = vunpack.c.l.b16 %v44
  %v200 = vunpack.c.l.b16 %v45
  %v201 = vunpack.c.l.b16 %v46
  %v202 = vunpack.c.l.b16 %v47
  %v203 = vunpack.c.l.b16 %v48
  %v204 = vunpack.c.l.b16 %v49
  %v205 = vunpack.c.l.b16 %v50
  %v206 = vunpack.c.l.b16 %v51
  %v207 = vunpack.c.l.b16 %v52
  %v208 = vunpack.c.l.b16 %v53
  %v209 = vunpack.c.l.b16 %v54
  %v210 = vunpack.c.l.b16 %v55
  %v211 = vunpack.c.l.b16 %v56
  %v212 = vunpack.c.l.b16 %v57
  %v213 = vunpack.c.l.b16 %v58
  %v214 = vunpack.c.l.b16 %v59
  %v215 = vpack.c.b16 %v197, %v196
  %v216 = vpack.c.b16 %v199, %v198
  %v217 = vpack.c.b16 %v201, %v200
  %v218 = vpack.c.b16 %v203, %v202
  %v219 = vpack.c.b16 %v205, %v204
  %v220 = vpack.c.b16 %v207, %v206
  %v221 = vpack.c.b16 %v209, %v208
  %v222 = vpack.c.b16 %v211, %v210
  %v223 = vpack.c.b16 %v213, %v212
  %v224 = vpack.c.b16 %v214, %v214
  %vm234 = vcmask 154624
  %v236 = vsel %vm234, %v139, 0
  %v239 = vsel %vm234, %v141, 0
  %v242 = vsel %vm234, %v143, 0
  %v245 = vsel %vm234, %v145, 0
  %v248 = vsel %vm234, %v147, 0
  %v251 = vsel %vm234, %v149, 0
  %v254 = vsel %vm234, %v151, 0
  %v257 = vsel %vm234, %v153, 0
  %v260 = vsel %vm234, %v155, 0
  %v263 = vsel %vm234, %v157, 0
  %v266 = vsel %vm234, %v159, 0
  %v269 = vsel %vm234, %v161, 0
  %v272 = vsel %vm234, %v163, 0
  %vm274 = vcmask 1040384
  %vm275 = vcmask 1041408
  %v276 = vsel %vm274, 4294967295, 65535
  %v277 = vsel %vm275, %v276, 0
  %v279 = vand.u32 %v224, %v277
  %281 = vmatprep.subr.bf16.mxu0 0
  %282 = vmatpush1.bf16.msra.mxu0 %v215
  %283 = vmatprep.subr.bf16.mxu0 0
  %284 = vmatpush1.bf16.msra.mxu0 %v216
  %285 = vmatprep.subr.bf16.mxu0 0
  %286 = vmatpush1.bf16.msra.mxu0 %v217
  %287 = vmatprep.subr.bf16.mxu0 0
  %288 = vmatpush1.bf16.msra.mxu0 %v218
  %289 = vmatprep.subr.bf16.mxu0 0
  %290 = vmatpush1.bf16.msra.mxu0 %v219
  %291 = vmatprep.subr.bf16.mxu0 0
  %292 = vmatpush1.bf16.msra.mxu0 %v220
  %293 = vmatprep.subr.bf16.mxu0 0
  %294 = vmatpush1.bf16.msra.mxu0 %v221
  %295 = vmatprep.subr.bf16.mxu0 0
  %296 = vmatpush1.bf16.msra.mxu0 %v222
  %297 = vmatprep.subr.bf16.mxu0 0
  %298 = vmatpush1.bf16.msra.mxu0 %v223
  %299 = vmatprep.subr.bf16.mxu0 0
  %300 = vmatpush1.bf16.msra.mxu0 %v279
  %301 = vmatprep.subr.bf16.mxu0 0
  %302 = vmatpush1.bf16.msra.mxu0 0
  %303 = vmatprep.subr.bf16.mxu0 0
  %304 = vmatpush1.bf16.msra.mxu0 0
  %305 = vmatprep.subr.bf16.mxu0 0
  %306 = vmatpush1.bf16.msra.mxu0 0
  %307 = vmatprep.subr.bf16.mxu0 0
  %308 = vmatpush1.bf16.msra.mxu0 0
  %309 = vmatprep.subr.bf16.mxu0 0
  %310 = vmatpush1.bf16.msra.mxu0 0
  %311 = vmatprep.subr.bf16.mxu0 0
  %312 = vmatpush1.bf16.msra.mxu0 0
  %313 = vmatprep.mubr.bf16.mxu0 %v236
  %314 = vmatmul.mubr.bf16.gmra.mrb[0].mxu0 %v138
  %v315 = vpop.f32.mrb[0].mxu0
  %v316 = vadd.f32 0.0, %v315
  %v317 = vpop.f32.mrb[0].mxu0
  %v318 = vpop.f32.mrb[0].mxu0
  %v319 = vadd.f32 0.0, %v318
  %v320 = vpop.f32.mrb[0].mxu0
  %321 = vmatprep.mubr.bf16.mxu0 %v239
  %322 = vmatmul.mubr.bf16.gmra.mrb[0].mxu0 %v140
  %v323 = vpop.f32.mrb[0].mxu0
  %v324 = vadd.f32 0.0, %v323
  %v325 = vpop.f32.mrb[0].mxu0
  %v326 = vpop.f32.mrb[0].mxu0
  %v327 = vadd.f32 0.0, %v326
  %v328 = vpop.f32.mrb[0].mxu0
  %329 = vmatprep.mubr.bf16.mxu0 %v242
  %330 = vmatmul.mubr.bf16.gmra.mrb[0].mxu0 %v142
  %v331 = vpop.f32.mrb[0].mxu0
  %v332 = vadd.f32 0.0, %v331
  %v333 = vpop.f32.mrb[0].mxu0
  %v334 = vpop.f32.mrb[0].mxu0
  %v335 = vadd.f32 0.0, %v334
  %v336 = vpop.f32.mrb[0].mxu0
  %337 = vmatprep.mubr.bf16.mxu0 %v245
  %338 = vmatmul.mubr.bf16.gmra.mrb[0].mxu0 %v144
  %v339 = vpop.f32.mrb[0].mxu0
  %v340 = vadd.f32 0.0, %v339
  %v341 = vpop.f32.mrb[0].mxu0
  %v342 = vpop.f32.mrb[0].mxu0
  %v343 = vadd.f32 0.0, %v342
  %v344 = vpop.f32.mrb[0].mxu0
  %345 = vmatprep.mubr.bf16.mxu0 %v248
  %346 = vmatmul.mubr.bf16.gmra.mrb[0].mxu0 %v146
  %v347 = vpop.f32.mrb[0].mxu0
  %v348 = vadd.f32 0.0, %v347
  %v349 = vpop.f32.mrb[0].mxu0
  %v350 = vpop.f32.mrb[0].mxu0
  %v351 = vadd.f32 0.0, %v350
  %v352 = vpop.f32.mrb[0].mxu0
  %353 = vmatprep.mubr.bf16.mxu0 %v251
  %354 = vmatmul.mubr.bf16.gmra.mrb[0].mxu0 %v148
  %v355 = vpop.f32.mrb[0].mxu0
  %v356 = vadd.f32 0.0, %v355
  %v357 = vpop.f32.mrb[0].mxu0
  %v358 = vpop.f32.mrb[0].mxu0
  %v359 = vadd.f32 0.0, %v358
  %v360 = vpop.f32.mrb[0].mxu0
  %361 = vmatprep.mubr.bf16.mxu0 %v254
  %362 = vmatmul.mubr.bf16.gmra.mrb[0].mxu0 %v150
  %v363 = vpop.f32.mrb[0].mxu0
  %v364 = vadd.f32 0.0, %v363
  %v365 = vpop.f32.mrb[0].mxu0
  %v366 = vpop.f32.mrb[0].mxu0
  %v367 = vadd.f32 0.0, %v366
  %v368 = vpop.f32.mrb[0].mxu0
  %369 = vmatprep.mubr.bf16.mxu0 %v257
  %370 = vmatmul.mubr.bf16.gmra.mrb[0].mxu0 %v152
  %v371 = vpop.f32.mrb[0].mxu0
  %v372 = vadd.f32 0.0, %v371
  %v373 = vpop.f32.mrb[0].mxu0
  %v374 = vpop.f32.mrb[0].mxu0
  %v375 = vadd.f32 0.0, %v374
  %v376 = vpop.f32.mrb[0].mxu0
  %377 = vmatprep.mubr.bf16.mxu0 %v260
  %378 = vmatmul.mubr.bf16.gmra.mrb[0].mxu0 %v154
  %v379 = vpop.f32.mrb[0].mxu0
  %v380 = vadd.f32 0.0, %v379
  %v381 = vpop.f32.mrb[0].mxu0
  %v382 = vpop.f32.mrb[0].mxu0
  %v383 = vadd.f32 0.0, %v382
  %v384 = vpop.f32.mrb[0].mxu0
  %385 = vmatprep.mubr.bf16.mxu0 %v263
  %386 = vmatmul.mubr.bf16.gmra.mrb[0].mxu0 %v156
  %v387 = vpop.f32.mrb[0].mxu0
  %v388 = vadd.f32 0.0, %v387
  %v389 = vpop.f32.mrb[0].mxu0
  %v390 = vpop.f32.mrb[0].mxu0
  %v391 = vadd.f32 0.0, %v390
  %v392 = vpop.f32.mrb[0].mxu0
  %393 = vmatprep.mubr.bf16.mxu0 %v266
  %394 = vmatmul.mubr.bf16.gmra.mrb[0].mxu0 %v158
  %v395 = vpop.f32.mrb[0].mxu0
  %v396 = vadd.f32 0.0, %v395
  %v397 = vpop.f32.mrb[0].mxu0
  %v398 = vpop.f32.mrb[0].mxu0
  %v399 = vadd.f32 0.0, %v398
  %v400 = vpop.f32.mrb[0].mxu0
  %401 = vmatprep.mubr.bf16.mxu0 %v269
  %402 = vmatmul.mubr.bf16.gmra.mrb[0].mxu0 %v160
  %v403 = vpop.f32.mrb[0].mxu0
  %v404 = vadd.f32 0.0, %v403
  %v405 = vpop.f32.mrb[0].mxu0
  %v406 = vpop.f32.mrb[0].mxu0
  %v407 = vadd.f32 0.0, %v406
  %v408 = vpop.f32.mrb[0].mxu0
  %409 = vmatprep.mubr.bf16.mxu0 %v272
  %410 = vmatmul.mubr.bf16.gmra.mrb[0].mxu0 %v162
  %v411 = vpop.f32.mrb[0].mxu0
  %v412 = vadd.f32 0.0, %v411
  %v413 = vpop.f32.mrb[0].mxu0
  %v414 = vpop.f32.mrb[0].mxu0
  %v415 = vadd.f32 0.0, %v414
  %v416 = vpop.f32.mrb[0].mxu0
  %417 = vdwg.mxu0
  %v418 = vld [vmem:[%s2] sm:$0x1]
  %v420 = vlaneseq
  %v421 = vshrl.u32 %v420, 7
  %v422 = vsub.s32 0, %v421
  %v423 = vrot.slane %v418, %v422
  %v425 = vsub.f32 %v316, %v423
  %v426 = vsub.f32 %v319, %v423
  %v427 = vsub.f32 %v324, %v423
  %v428 = vsub.f32 %v327, %v423
  %v429 = vsub.f32 %v332, %v423
  %v430 = vsub.f32 %v335, %v423
  %v431 = vsub.f32 %v340, %v423
  %v432 = vsub.f32 %v343, %v423
  %v433 = vsub.f32 %v348, %v423
  %v434 = vsub.f32 %v351, %v423
  %v435 = vsub.f32 %v356, %v423
  %v436 = vsub.f32 %v359, %v423
  %v437 = vsub.f32 %v364, %v423
  %v438 = vsub.f32 %v367, %v423
  %v439 = vsub.f32 %v372, %v423
  %v440 = vsub.f32 %v375, %v423
  %v441 = vsub.f32 %v380, %v423
  %v442 = vsub.f32 %v383, %v423
  %v443 = vsub.f32 %v388, %v423
  %v444 = vsub.f32 %v391, %v423
  %v445 = vsub.f32 %v396, %v423
  %v446 = vsub.f32 %v399, %v423
  %v447 = vsub.f32 %v404, %v423
  %v448 = vsub.f32 %v407, %v423
  %v449 = vsub.f32 %v412, %v423
  %v450 = vsub.f32 %v415, %v423
  %v451 = vmax.f32 %v425, 0.0
  %v452 = vmax.f32 %v426, 0.0
  %v453 = vmax.f32 %v427, 0.0
  %v454 = vmax.f32 %v428, 0.0
  %v455 = vmax.f32 %v429, 0.0
  %v456 = vmax.f32 %v430, 0.0
  %v457 = vmax.f32 %v431, 0.0
  %v458 = vmax.f32 %v432, 0.0
  %v459 = vmax.f32 %v433, 0.0
  %v460 = vmax.f32 %v434, 0.0
  %v461 = vmax.f32 %v435, 0.0
  %v462 = vmax.f32 %v436, 0.0
  %v463 = vmax.f32 %v437, 0.0
  %v464 = vmax.f32 %v438, 0.0
  %v465 = vmax.f32 %v439, 0.0
  %v466 = vmax.f32 %v440, 0.0
  %v467 = vmax.f32 %v441, 0.0
  %v468 = vmax.f32 %v442, 0.0
  %v469 = vmax.f32 %v443, 0.0
  %v470 = vmax.f32 %v444, 0.0
  %v471 = vmax.f32 %v445, 0.0
  %v472 = vmax.f32 %v446, 0.0
  %v473 = vmax.f32 %v447, 0.0
  %v474 = vmax.f32 %v448, 0.0
  %v475 = vmax.f32 %v449, 0.0
  %v476 = vmax.f32 %v450, 0.0
  %v477 = vpack.c.bf16 %v452, %v451
  %v478 = vpack.c.bf16 %v454, %v453
  %v479 = vpack.c.bf16 %v456, %v455
  %v480 = vpack.c.bf16 %v458, %v457
  %v481 = vpack.c.bf16 %v460, %v459
  %v482 = vpack.c.bf16 %v462, %v461
  %v483 = vpack.c.bf16 %v464, %v463
  %v484 = vpack.c.bf16 %v466, %v465
  %v485 = vpack.c.bf16 %v468, %v467
  %v486 = vpack.c.bf16 %v470, %v469
  %v487 = vpack.c.bf16 %v472, %v471
  %v488 = vpack.c.bf16 %v474, %v473
  %v489 = vpack.c.bf16 %v476, %v475
  %v503 = vunpack.c.l.b16 %v477
  %v504 = vunpack.c.h.b16 %v477
  %v505 = vunpack.c.l.b16 %v478
  %v506 = vunpack.c.h.b16 %v478
  %v507 = vunpack.c.l.b16 %v479
  %v508 = vunpack.c.h.b16 %v479
  %v509 = vunpack.c.l.b16 %v480
  %v510 = vunpack.c.h.b16 %v480
  %v511 = vunpack.c.l.b16 %v481
  %v512 = vunpack.c.h.b16 %v481
  %v513 = vunpack.c.l.b16 %v482
  %v514 = vunpack.c.h.b16 %v482
  %v515 = vunpack.c.l.b16 %v483
  %v516 = vunpack.c.h.b16 %v483
  %v517 = vunpack.c.l.b16 %v484
  %v518 = vunpack.c.h.b16 %v484
  %v519 = vunpack.c.l.b16 %v485
  %v520 = vunpack.c.h.b16 %v485
  %v521 = vunpack.c.l.b16 %v486
  %v522 = vunpack.c.h.b16 %v486
  %v523 = vunpack.c.l.b16 %v487
  %v524 = vunpack.c.h.b16 %v487
  %v525 = vunpack.c.l.b16 %v488
  %v526 = vunpack.c.h.b16 %v488
  %v527 = vunpack.c.l.b16 %v489
  %v528 = vunpack.c.h.b16 %v489
  %v529 = vpack.c.b16 %v503, %v503
  %v530 = vpack.c.b16 %v504, %v504
  %v531 = vpack.c.b16 %v505, %v505
  %v532 = vpack.c.b16 %v506, %v506
  %v533 = vpack.c.b16 %v507, %v507
  %v534 = vpack.c.b16 %v508, %v508
  %v535 = vpack.c.b16 %v509, %v509
  %v536 = vpack.c.b16 %v510, %v510
  %v537 = vpack.c.b16 %v511, %v511
  %v538 = vpack.c.b16 %v512, %v512
  %v539 = vpack.c.b16 %v513, %v513
  %v540 = vpack.c.b16 %v514, %v514
  %v541 = vpack.c.b16 %v515, %v515
  %v542 = vpack.c.b16 %v516, %v516
  %v543 = vpack.c.b16 %v517, %v517
  %v544 = vpack.c.b16 %v518, %v518
  %v545 = vpack.c.b16 %v519, %v519
  %v546 = vpack.c.b16 %v520, %v520
  %v547 = vpack.c.b16 %v521, %v521
  %v548 = vpack.c.b16 %v522, %v522
  %v549 = vpack.c.b16 %v523, %v523
  %v550 = vpack.c.b16 %v524, %v524
  %v551 = vpack.c.b16 %v525, %v525
  %v552 = vpack.c.b16 %v526, %v526
  %v553 = vpack.c.b16 %v527, %v527
  %v554 = vpack.c.b16 %v528, %v528
  %581 = vst [vmem:[%s3] sm:$0xf] %v529
  %582 = vst [vmem:[%s3 + $0x4] sm:$0xf] %v530
  %583 = vst [vmem:[%s3 + $0x8] sm:$0xf] %v531
  %584 = vst [vmem:[%s3 + $0xc] sm:$0xf] %v532
  %585 = vst [vmem:[%s3 + $0x10] sm:$0xf] %v533
  %586 = vst [vmem:[%s3 + $0x14] sm:$0xf] %v534
  %587 = vst [vmem:[%s3 + $0x18] sm:$0xf] %v535
  %588 = vst [vmem:[%s3 + $0x1c] sm:$0xf] %v536
  %589 = vst [vmem:[%s3 + $0x20] sm:$0xf] %v537
  %590 = vst [vmem:[%s3 + $0x24] sm:$0xf] %v538
  %591 = vst [vmem:[%s3 + $0x28] sm:$0xf] %v539
  %592 = vst [vmem:[%s3 + $0x2c] sm:$0xf] %v540
  %593 = vst [vmem:[%s3 + $0x30] sm:$0xf] %v541
  %594 = vst [vmem:[%s3 + $0x34] sm:$0xf] %v542
  %595 = vst [vmem:[%s3 + $0x38] sm:$0xf] %v543
  %596 = vst [vmem:[%s3 + $0x3c] sm:$0xf] %v544
  %597 = vst [vmem:[%s3 + $0x40] sm:$0xf] %v545
  %598 = vst [vmem:[%s3 + $0x44] sm:$0xf] %v546
  %599 = vst [vmem:[%s3 + $0x48] sm:$0xf] %v547
  %600 = vst [vmem:[%s3 + $0x4c] sm:$0xf] %v548
  %601 = vst [vmem:[%s3 + $0x50] sm:$0xf] %v549
  %602 = vst [vmem:[%s3 + $0x54] sm:$0xf] %v550
  %603 = vst [vmem:[%s3 + $0x58] sm:$0xf] %v551
  %604 = vst [vmem:[%s3 + $0x5c] sm:$0xf] %v552
  %605 = vst [vmem:[%s3 + $0x60] sm:$0xf] %v553
  %606 = vst [vmem:[%s3 + $0x64] sm:$0xf] %v554
  // Predicated region
  $region14: #{network_forward.3} parent=0 // pred_check
    _
  $region15: #{network_forward.3} parent=0 // pred_check_branch
    %608 = sbr.rel (0) target = $region17
  $region16: #{network_forward.3} parent=0 // pred_region
    _
  $region17: #{network_forward.3} parent=0 // pred_fallthru
    _
  // Predicated region
  $region18: #{network_forward.3} parent=0 // pred_check
    _
  $region19: #{network_forward.3} parent=0 // pred_check_branch
    %610 = sbr.rel (0) target = $region21
  $region20: #{network_forward.3} parent=0 // pred_region
    _
  $region21: #{network_forward.3} parent=0 // pred_fallthru
    _

</llo_original>
